<compile_context>
chip_gen: v5e
topology: v5e:2x2
jax: 0.10.0
libtpu: 0.0.40
codegen_flags: <defaults>
</compile_context>

<pallas_src>
import jax
import jax.numpy as jnp
from jax.experimental import pallas as pl
from jax.experimental.pallas import tpu as pltpu


def _round_up(x: int, m: int) -> int:
    return (x + m - 1) // m * m


def _op_embedding_kernel(idx_ref, table_ref, out_ref):
    # idx_ref:   (TN, 1)           int32   -- current N tile of op indices
    # table_ref: (num_ops_p, D_p)  float32 -- resident across all grid steps
    # out_ref:   (TN, D_p)         float32
    idx = idx_ref[...]                                         # (TN, 1)
    tn = idx.shape[0]
    num_ops_p = table_ref.shape[0]
    # One-hot via 2-D broadcasted iota (1-D iota is not supported on TPU).
    op_iota = jax.lax.broadcasted_iota(jnp.int32, (tn, num_ops_p), 1)
    one_hot = (idx == op_iota).astype(table_ref.dtype)         # (TN, num_ops_p)
    # Gather == one_hot @ table on the MXU, accumulated in f32.
    out_ref[...] = jnp.dot(
        one_hot, table_ref[...], preferred_element_type=jnp.float32
    ).astype(out_ref.dtype)


def op_embedding(op_indices: jax.Array, embedding_table: jax.Array,
                 *, block_n: int = 256) -> jax.Array:
    """Equivalent of nn.Embedding(num_ops, embed_d)(op_indices)."""
    n = op_indices.shape[0]
    num_ops, embed_d = embedding_table.shape
    dtype = embedding_table.dtype
    itemsize = jnp.dtype(dtype).itemsize

    # Pad contraction (num_ops) and output lanes (embed_d) to 128 multiples
    # (only materialize a padded copy when actually needed).
    num_ops_p = _round_up(num_ops, 128)
    d_p = _round_up(embed_d, 128)

    # Pick the N tile: keep the per-tile one-hot under ~512 KiB (f32), keep it
    # a multiple of 8 (sublane granularity), and don't exceed the (padded) N.
    max_tn = max(8, ((512 * 1024) // (4 * num_ops_p)) // 8 * 8)
    tn = min(block_n, max_tn, _round_up(n, 8))
    tn = max(8, _round_up(tn, 8))
    n_p = _round_up(n, tn)

    # Zero-pad inputs once in the wrapper (padded index rows read row 0 of the
    # table; those output rows are sliced off below).
    idx = op_indices.astype(jnp.int32)
    if n_p != n:
        idx = jnp.pad(idx, (0, n_p - n))
    idx2d = idx.reshape(n_p, 1)

    if (num_ops_p, d_p) != (num_ops, embed_d):
        table_p = jnp.pad(
            embedding_table, ((0, num_ops_p - num_ops), (0, d_p - embed_d))
        )
    else:
        table_p = embedding_table

    grid = (n_p // tn,)

    table_bytes = num_ops_p * d_p * itemsize
    out_bytes = n_p * d_p * itemsize
    idx_bytes = n_p * 4
    cost = pl.CostEstimate(
        flops=2 * n_p * num_ops_p * d_p,
        transcendentals=0,
        bytes_accessed=table_bytes + out_bytes + idx_bytes,
    )

    # VMEM footprint: resident table + double-buffered idx/out tiles. Raise the
    # scoped limit only when needed; never exceed v7x's 64 MiB physical VMEM.
    footprint = table_bytes + 2 * (tn * 4) + 2 * (tn * d_p * itemsize)
    cp_kwargs = dict(dimension_semantics=("parallel",))
    if footprint > 16 * 1024 * 1024:
        cp_kwargs["vmem_limit_bytes"] = min(
            int(footprint * 1.25) + (1 << 20), 64 * 1024 * 1024
        )

    out_p = pl.pallas_call(
        _op_embedding_kernel,
        out_shape=jax.ShapeDtypeStruct((n_p, d_p), dtype),
        grid_spec=pltpu.PrefetchScalarGridSpec(
            num_scalar_prefetch=0,
            grid=grid,
            in_specs=[
                pl.BlockSpec((tn, 1), lambda i: (i, 0)),           # idx tile
                pl.BlockSpec((num_ops_p, d_p), lambda i: (0, 0)),  # resident table
            ],
            out_specs=pl.BlockSpec((tn, d_p), lambda i: (i, 0)),
        ),
        compiler_params=pltpu.CompilerParams(**cp_kwargs),
        cost_estimate=cost,
    )(idx2d, table_p)

    if (n_p, d_p) != (n, embed_d):
        out_p = out_p[:n, :embed_d]
    return out_p


class Graph:
    """Minimal stand-in for the torch_geometric-style graph object."""

    def __init__(self, x, op_indices):
        self.x = x
        self.op_indices = op_indices


class OpEmbedding:
    """Embeds operation nodes into feature 'op_e' (Pallas version)."""

    def __init__(self, num_ops: int, embed_d: int, key, l2reg: float = 1e-4):
        # nn.Embedding default init ~ N(0, 1); deterministic via provided key.
        self.embedding_table = jax.random.normal(
            key, (num_ops, embed_d), dtype=jnp.float32
        )

    def __call__(self, graph: Graph) -> Graph:
        graph.x = op_embedding(graph.op_indices, self.embedding_table)
        return graph


if __name__ == "__main__":
    key = jax.random.PRNGKey(0)
    k_table, k_idx, k_feat = jax.random.split(key, 3)

    num_ops, embed_d, n_nodes = 16, 32, 8

    module = OpEmbedding(num_ops, embed_d, k_table)

    op_indices = jax.random.randint(k_idx, (n_nodes,), 0, num_ops, dtype=jnp.int32)
    op_features = jax.random.normal(k_feat, (n_nodes, 4), dtype=jnp.float32)  # replaced by forward
    graph = Graph(op_features, op_indices)

    graph = module(graph)
    out = jax.block_until_ready(graph.x)

    # correctness check vs plain JAX gather
    ref = module.embedding_table[op_indices]
    assert out.shape == (n_nodes, embed_d), out.shape
    assert jnp.allclose(out, ref, atol=1e-6), "mismatch vs reference gather"

    print("KERNEL_OK")
</pallas_src>

<mosaic_0001>
module attributes {stable_mosaic.version = 11 : i64} {
  func.func @_op_embedding_kernel(%arg0: i32, %arg1: memref<8x1xi32, #tpu.memory_space<vmem>>, %arg2: memref<128x128xf32, #tpu.memory_space<vmem>>, %arg3: memref<8x128xf32, #tpu.memory_space<vmem>>) attributes {dimension_semantics = [#tpu.dimension_semantics<parallel>], iteration_bounds = array<i64: 1>, scalar_prefetch = 0 : i64, scratch_operands = 0 : i64, tpu.core_type = #tpu.core_type<tc>, window_params = [{transform_indices = @transform_0, window_bounds = array<i64: 8, 1>}, {pipeline_mode = #tpu.pipeline_mode<synchronous>, transform_indices = @transform_1, window_bounds = array<i64: 128, 128>}, {transform_indices = @transform_2, window_bounds = array<i64: 8, 128>}]} {
    %c0 = arith.constant 0 : index
    %c0_0 = arith.constant 0 : index
    %0 = vector.load %arg1[%c0, %c0_0] : memref<8x1xi32, #tpu.memory_space<vmem>>, vector<8x1xi32>
    %1 = tpu.iota {dimensions = array<i32: 1>} : vector<8x128xi32>
    %2 = vector.broadcast %0 : vector<8x1xi32> to vector<8x128xi32>
    %3 = arith.cmpi eq, %2, %1 : vector<8x128xi32>
    %4 = arith.extui %3 : vector<8x128xi1> to vector<8x128xi32>
    %5 = arith.sitofp %4 : vector<8x128xi32> to vector<8x128xf32>
    %c0_1 = arith.constant 0 : index
    %c0_2 = arith.constant 0 : index
    %6 = vector.load %arg2[%c0_1, %c0_2] : memref<128x128xf32, #tpu.memory_space<vmem>>, vector<128x128xf32>
    %cst = arith.constant dense<0.000000e+00> : vector<8x128xf32>
    %7 = tpu.matmul %5, %6, %cst {dimension_numbers = #tpu.dot_dimension_numbers<[1], [0], [0], [1], [0, 0, 1, 1], [], []>} : vector<8x128xf32>, vector<128x128xf32>, vector<8x128xf32> -> vector<8x128xf32>
    %c0_3 = arith.constant 0 : index
    %c0_4 = arith.constant 0 : index
    %8 = vector.load %arg3[%c0_3, %c0_4] : memref<8x128xf32, #tpu.memory_space<vmem>>, vector<8x128xf32>
    tpu.vector_store %arg3[%c0_3, %c0_4], %7 {strides = array<i32>} : memref<8x128xf32, #tpu.memory_space<vmem>>, vector<8x128xf32>,
    return
  }
  func.func @transform_0(%arg0: i32) -> (i32, i32) {
    %c0_i32 = arith.constant 0 : i32
    %c0_i32_0 = arith.constant 0 : i32
    return %arg0, %c0_i32 : i32, i32
  }
  func.func @transform_1(%arg0: i32) -> (i32, i32) {
    %c0_i32 = arith.constant 0 : i32
    %c0_i32_0 = arith.constant 0 : i32
    %c0_i32_1 = arith.constant 0 : i32
    return %c0_i32, %c0_i32_0 : i32, i32
  }
  func.func @transform_2(%arg0: i32) -> (i32, i32) {
    %c0_i32 = arith.constant 0 : i32
    %c0_i32_0 = arith.constant 0 : i32
    return %arg0, %c0_i32 : i32, i32
  }
}

</mosaic_0001>

<llo_original>
// kernel: tpu_custom_call.1
$region0: #{tpu_custom_call.1}
  #allocation0 [shape = 'u32[]', space=smem, size = 0x4, offset = 0x4, fixed_abs, tag = 'smem constant byte address 0x4 - core index']
  #allocation1 [shape = 'u32[72,128]{1,0:T(1,128)}', space=vmem, size = 0x9000, scoped, tag = 'internal scratch']
  %s0 = inlined_call_operand.vmem [shape: s32[8,1], index: 0, kind: input, shape index: {}]
  %s1 = inlined_call_operand.hbm [shape: f32[128,128], index: 1, kind: input, shape index: {}]
  %s2 = inlined_call_operand.hbm [shape: f32[8,128], index: 2, kind: output, shape index: {}]
  %s3 = sld [smem:[#allocation0]]
  $region22: #{tpu_custom_call.1} parent=0
    _
  %s5 = ssub.s32 1, %s3
  %s6 = scalar_select 0, %s5, %s3
  $region1: #{tpu_custom_call.1} parent=0
    #allocation2 [shape = 'u8[65536]{0}', space=vmem, size = 0x10000, scoped, tag = 'input window, operand 1, single buffered']
    #allocation3 [shape = 's32[1]{0}', space=sflag, size = 0x4, scoped, tag = 'scoped memory for tpu_custom_call.1']
    #allocation4 [shape = 's32[1]{0}', space=sflag, size = 0x4, scoped, tag = 'scoped memory for tpu_custom_call.1']
    #allocation5 [shape = 'u8[4096]{0}', space=vmem, size = 0x1000, scoped, tag = 'output window, operand 0, single buffered']
    %7 = vsyncpa [#allocation3], 0
    %8 = vsyncpa [#allocation4], 0
    // Predicated region
    $region2: #{tpu_custom_call.1} parent=1 // pred_check
      _
    $region3: #{tpu_custom_call.1} parent=1 // pred_check_branch
      %10 = sbr.rel (0) target = $region5
    $region4: #{tpu_custom_call.1} parent=1 // pred_region
      _
    $region5: #{tpu_custom_call.1} parent=1 // pred_fallthru
      _
    // Predicated region
    $region6: #{tpu_custom_call.1} parent=1 // pred_check
      _
    $region7: #{tpu_custom_call.1} parent=1 // pred_check_branch
      %12 = sbr.rel (0) target = $region9
    $region8: #{tpu_custom_call.1} parent=1 // pred_region
      %14 = vsyncadd [#allocation3], 0
      %s15 = sshll.u32 %s1, 4
      %s16 = int_to_ptr.hbm [resolvable:$true] %s15
      %s17 = sshll.u32 [#allocation2], 4
      %s18 = int_to_ptr.vmem [resolvable:$true] %s17
      %23 = dma.hbm_to_vmem [thread:$0]  %s16, 2048, %s18, [#allocation3], 128, 128, 8
    $region9: #{tpu_custom_call.1} parent=1 // pred_fallthru
      _
    // Predicated region
    $region10: #{tpu_custom_call.1} parent=1 // pred_check
      _
    $region11: #{tpu_custom_call.1} parent=1 // pred_check_branch
      %25 = sbr.rel (0) target = $region13
    $region12: #{tpu_custom_call.1} parent=1 // pred_region
      %27 = dma.done [#allocation3], 2048
    $region13: #{tpu_custom_call.1} parent=1 // pred_fallthru
      _
    %v28 = vld [vmem:[%s0] sm:$0xff]
    %v29 = vlaneseq
    %v30 = vand.u32 %v29, 127
    %31 = vset.pattern.permute.xlu0 0
    %32 = vperm.xlu0 %31, %v28
    %v33 = vpop.permute.xlu0 %32
    %vm34 = vcmp.eq.s32.totalorder %v33, %v30
    %v35 = vsel %vm34, 1, 0
    %v36 = vcvt.s32.f32 %v35
    %v37 = vld [vmem:[#allocation2] sm:$0xff]
    %v38 = vld [vmem:[#allocation2 + $0x8] sm:$0xff]
    %v39 = vld [vmem:[#allocation2 + $0x10] sm:$0xff]
    %v40 = vld [vmem:[#allocation2 + $0x18] sm:$0xff]
    %v41 = vld [vmem:[#allocation2 + $0x20] sm:$0xff]
    %v42 = vld [vmem:[#allocation2 + $0x28] sm:$0xff]
    %v43 = vld [vmem:[#allocation2 + $0x30] sm:$0xff]
    %v44 = vld [vmem:[#allocation2 + $0x38] sm:$0xff]
    %v45 = vld [vmem:[#allocation2 + $0x40] sm:$0xff]
    %v46 = vld [vmem:[#allocation2 + $0x48] sm:$0xff]
    %v47 = vld [vmem:[#allocation2 + $0x50] sm:$0xff]
    %v48 = vld [vmem:[#allocation2 + $0x58] sm:$0xff]
    %v49 = vld [vmem:[#allocation2 + $0x60] sm:$0xff]
    %v50 = vld [vmem:[#allocation2 + $0x68] sm:$0xff]
    %v51 = vld [vmem:[#allocation2 + $0x70] sm:$0xff]
    %v52 = vld [vmem:[#allocation2 + $0x78] sm:$0xff]
    %53 = vmatpush.msra.mxu0 %v52
    %54 = vmatpush.msra.mxu0 %v51
    %55 = vmatpush.msra.mxu0 %v50
    %56 = vmatpush.msra.mxu0 %v49
    %57 = vmatpush.msra.mxu0 %v48
    %58 = vmatpush.msra.mxu0 %v47
    %59 = vmatpush.msra.mxu0 %v46
    %60 = vmatpush.msra.mxu0 %v45
    %61 = vmatpush.msra.mxu0 %v44
    %62 = vmatpush.msra.mxu0 %v43
    %63 = vmatpush.msra.mxu0 %v42
    %64 = vmatpush.msra.mxu0 %v41
    %65 = vmatpush.msra.mxu0 %v40
    %66 = vmatpush.msra.mxu0 %v39
    %67 = vmatpush.msra.mxu0 %v38
    %68 = vmatpush.msra.mxu0 %v37
    %69 = vmatmul.f32.gmra.mxu0 %v36
    %v70 = vpop.f32.mrf.mxu0
    %v71 = vadd.f32 0.0, %v70
    %72 = vdwg.mxu0
    %73 = vst [vmem:[#allocation5] sm:$0xff] %v71
    // Predicated region
    $region14: #{tpu_custom_call.1} parent=1 // pred_check
      _
    $region15: #{tpu_custom_call.1} parent=1 // pred_check_branch
      %75 = sbr.rel (0) target = $region17
    $region16: #{tpu_custom_call.1} parent=1 // pred_region
      %77 = vsyncadd [#allocation4], 0
      %s79 = sshll.u32 [#allocation5], 4
      %s80 = int_to_ptr.vmem [resolvable:$true] %s79
      %s81 = sshll.u32 %s2, 4
      %s82 = int_to_ptr.hbm [resolvable:$true] %s81
      %84 = dma.vmem_to_hbm [thread:$0]  %s80, 128, %s82, [#allocation4]
    $region17: #{tpu_custom_call.1} parent=1 // pred_fallthru
      _
    // Predicated region
    $region18: #{tpu_custom_call.1} parent=1 // pred_check
      _
    $region19: #{tpu_custom_call.1} parent=1 // pred_check_branch
      %86 = sbr.rel (0) target = $region21
    $region20: #{tpu_custom_call.1} parent=1 // pred_region
      %88 = dma.done [#allocation4], 128
    $region21: #{tpu_custom_call.1} parent=1 // pred_fallthru
      _
    %89 = vsyncpa [#allocation3], 1
    %90 = vsyncpa [#allocation4], 1

</llo_original>
